<compile_context>
chip_gen: v7x
topology: tpu7x:2x2x1
jax: 0.10.0
libtpu: 0.0.40
codegen_flags: <defaults>
</compile_context>

<pallas_src>
import jax
import jax.numpy as jnp
import numpy as np
from jax import lax
from jax.experimental import pallas as pl
from jax.experimental.pallas import tpu as pltpu

LANE = 128
EPS = 1e-5


def _round_up(x, m):
    return (x + m - 1) // m * m


def _vmem_budget_bytes():
    """Per-generation scoped-VMEM budget: ~3/4 of physical VMEM, capped at 96 MiB.
    v5e/v6e (128 MiB) -> 96 MiB; v7x (64 MiB) -> 48 MiB; fallback -> 48 MiB."""
    try:
        cap = pltpu.get_tpu_info().vmem_capacity_bytes
    except Exception:
        cap = 64 * 1024 * 1024          # conservative (v7x-sized) fallback
    return int(min(cap * 3 // 4, 96 * 1024 * 1024))


def _pick_tm(m, k, cout, itemsize, budget):
    """Largest M tile (multiple of 128, <= 4096) whose double-buffered working
    set (patch tile + y tile + out tile) fits well inside the VMEM budget."""
    per_row = 2 * k * itemsize + 2 * cout * itemsize + 2 * cout * 4
    tm = (budget // 2) // max(per_row, 1)
    tm = max(LANE, min(int(tm), 4096))
    tm = (tm // LANE) * LANE
    return min(tm, _round_up(m, LANE))


# ---------------------------------------------------------------------------
# Kernels
# ---------------------------------------------------------------------------
def _conv_stats_kernel(p_ref, w_ref, y_ref, sum_ref, ssq_ref):
    """Per M-tile: conv-as-matmul (channel-major, lane-dense output) + partial
    per-channel sum / sum-of-squares accumulated across the inner grid axis.

    p_ref   : (TM, K)      im2col patch tile
    w_ref   : (Cout, K)    flattened conv weight
    y_ref   : (Cout, TM)   conv output tile (channel-major, lane-dense)
    sum_ref : (1, Cout, 1) partial per-channel sum   (resident across M tiles)
    ssq_ref : (1, Cout, 1) partial per-channel sum of squares
    """
    @pl.when(pl.program_id(1) == 0)
    def _():
        sum_ref[...] = jnp.zeros_like(sum_ref)
        ssq_ref[...] = jnp.zeros_like(ssq_ref)

    # (Cout, K) . (TM, K)^T -> (Cout, TM) on the MXU; f32 accumulation.
    y = lax.dot_general(
        w_ref[...], p_ref[...],
        dimension_numbers=(((1,), (1,)), ((), ())),
        preferred_element_type=jnp.float32)
    # NOTE: conv bias intentionally omitted -- it is cancelled exactly by the
    # training-mode BatchNorm mean subtraction that follows.
    y_ref[...] = y.astype(y_ref.dtype)
    sum_ref[...] += jnp.sum(y, axis=1, keepdims=True)[None, :, :]
    ssq_ref[...] += jnp.sum(y * y, axis=1, keepdims=True)[None, :, :]


def _scale_shift_kernel(y_ref, scale_ref, shift_ref, o_ref):
    """Folded BatchNorm epilogue: one FMA pass, o = y * scale + shift."""
    o_ref[...] = y_ref[...].astype(jnp.float32) * scale_ref[...] + shift_ref[...]


# ---------------------------------------------------------------------------
# Wrapper
# ---------------------------------------------------------------------------
def _extract_patches_nchw(x_nchw, kh, kw, stride, pad, dtype):
    """im2col glue: NCHW -> (N*OH*OW, Cin*kh*kw), K ordered (ci, kh, kw)."""
    N, C, H, W = x_nchw.shape
    x = jnp.transpose(x_nchw, (0, 2, 3, 1)).astype(dtype)        # NHWC
    xp = jnp.pad(x, ((0, 0), (pad, pad), (pad, pad), (0, 0)))
    OH = (H + 2 * pad - kh) // stride + 1
    OW = (W + 2 * pad - kw) // stride + 1
    taps = []
    for i in range(kh):
        for j in range(kw):
            taps.append(xp[:, i:i + stride * OH:stride, j:j + stride * OW:stride, :])
    p = jnp.stack(taps, axis=-1)                                  # (N,OH,OW,C,16)
    return p.reshape(N * OH * OW, C * kh * kw), OH, OW


def brown_block_forward(x_nchw, weight, bias, gamma, beta, *,
                        eps=EPS, compute_dtype=jnp.float32):
    """x: (N, Cin, H, W) f32. weight: (Cout, Cin, 4, 4). Returns (N, Cout, OH, OW) f32."""
    N, Cin, H, W = x_nchw.shape
    Cout = weight.shape[0]
    KH = KW = 4
    # `bias` accepted only for API parity: it is cancelled by the BN mean.
    del bias

    patches, OH, OW = _extract_patches_nchw(
        x_nchw, KH, KW, stride=2, pad=1, dtype=compute_dtype)
    M, K = patches.shape
    itemsize = jnp.dtype(compute_dtype).itemsize

    budget = _vmem_budget_bytes()
    TM = _pick_tm(M, K, Cout, itemsize, budget)

    # Split the M-tile loop into 2 chunks when possible so a 2-TensorCore chip
    # (v7x) can shard Pass A over both cores; each chunk owns its own partial
    # stats row.  On 1-TC chips the extra axis is just a harmless loop.
    n_tiles = _round_up(M, TM) // TM
    split = 2 if n_tiles >= 2 else 1
    tiles_pc = (n_tiles + split - 1) // split            # tiles per chunk
    Mp = split * tiles_pc * TM
    if Mp != M:
        # Zero-padded rows give y == 0 (no bias), so they contribute nothing to
        # sum/ssq; dividing by the true M keeps BN exact.
        patches = jnp.pad(patches, ((0, Mp - M), (0, 0)))

    # Channel-major flattened weight; K ordering (ci, kh, kw) matches patches.
    w_t = weight.reshape(Cout, K).astype(compute_dtype)

    # -------- Pass A: conv (MXU) + per-channel partial statistics ----------
    y_t, psum, pssq = pl.pallas_call(
        _conv_stats_kernel,
        out_shape=(
            jax.ShapeDtypeStruct((Cout, Mp), compute_dtype),
            jax.ShapeDtypeStruct((split, Cout, 1), jnp.float32),
            jax.ShapeDtypeStruct((split, Cout, 1), jnp.float32),
        ),
        grid=(split, tiles_pc),
        in_specs=[
            pl.BlockSpec((TM, K), lambda c, i: (c * tiles_pc + i, 0)),
            pl.BlockSpec((Cout, K), lambda c, i: (0, 0)),
        ],
        out_specs=(
            pl.BlockSpec((Cout, TM), lambda c, i: (0, c * tiles_pc + i)),
            pl.BlockSpec((1, Cout, 1), lambda c, i: (c, 0, 0)),   # per-chunk partials
            pl.BlockSpec((1, Cout, 1), lambda c, i: (c, 0, 0)),
        ),
        compiler_params=pltpu.CompilerParams(
            dimension_semantics=("parallel", "arbitrary"),
            vmem_limit_bytes=budget,
        ),
    )(patches, w_t)

    # -------- Fold BN into a single per-channel scale/shift ----------------
    ch_sum = jnp.sum(psum, axis=0)                        # (Cout, 1)
    ch_ssq = jnp.sum(pssq, axis=0)
    mean = ch_sum / float(M)
    var = jnp.maximum(ch_ssq / float(M) - mean * mean, 0.0)
    scale = gamma.reshape(Cout, 1).astype(jnp.float32) * lax.rsqrt(var + eps)
    shift = beta.reshape(Cout, 1).astype(jnp.float32) - mean * scale

    # -------- Pass B: normalize -- one FMA pass, fully parallel over M ------
    out_t = pl.pallas_call(
        _scale_shift_kernel,
        out_shape=jax.ShapeDtypeStruct((Cout, Mp), jnp.float32),
        grid=(Mp // TM,),
        in_specs=[
            pl.BlockSpec((Cout, TM), lambda i: (0, i)),
            pl.BlockSpec((Cout, 1), lambda i: (0, 0)),
            pl.BlockSpec((Cout, 1), lambda i: (0, 0)),
        ],
        out_specs=pl.BlockSpec((Cout, TM), lambda i: (0, i)),
        compiler_params=pltpu.CompilerParams(
            dimension_semantics=("parallel",),
            vmem_limit_bytes=budget,
        ),
    )(y_t, scale, shift)

    # Channel-major -> NCHW: only the two leading axes are permuted, moving
    # contiguous OH*OW blocks (much cheaper than an inner-strided transpose).
    out = out_t[:, :M].reshape(Cout, N, OH, OW)
    return jnp.transpose(out, (1, 0, 2, 3))


# ---------------------------------------------------------------------------
# Pure-JAX reference (matches PyTorch brown_block: Conv2d -> BatchNorm2d train)
# ---------------------------------------------------------------------------
def _reference(x, weight, bias, gamma, beta):
    y = lax.conv_general_dilated(
        x, weight, window_strides=(2, 2), padding=((1, 1), (1, 1)),
        dimension_numbers=("NCHW", "OIHW", "NCHW"),
    ) + bias.reshape(1, -1, 1, 1)
    mean = jnp.mean(y, axis=(0, 2, 3), keepdims=True)
    var = jnp.mean((y - mean) ** 2, axis=(0, 2, 3), keepdims=True)
    y = (y - mean) / jnp.sqrt(var + EPS)
    return y * gamma.reshape(1, -1, 1, 1) + beta.reshape(1, -1, 1, 1)


def _make_inputs(key, N, Cin, H, W, Cout):
    k_x, k_w, k_b, k_g, k_be = jax.random.split(key, 5)
    x = jax.random.normal(k_x, (N, Cin, H, W), dtype=jnp.float32)
    weight = jax.random.normal(k_w, (Cout, Cin, 4, 4), dtype=jnp.float32) * 0.1
    bias = jax.random.normal(k_b, (Cout,), dtype=jnp.float32) * 0.1
    gamma = 1.0 + 0.1 * jax.random.normal(k_g, (Cout,), dtype=jnp.float32)
    beta = 0.1 * jax.random.normal(k_be, (Cout,), dtype=jnp.float32)
    return x, weight, bias, gamma, beta


if __name__ == "__main__":
    key = jax.random.PRNGKey(0)
    k0, k1 = jax.random.split(key, 2)

    # --- primary (module-sized) test: exact f32 path -----------------------
    x, weight, bias, gamma, beta = _make_inputs(k0, N=2, Cin=4, H=16, W=16, Cout=8)
    ref = jax.block_until_ready(_reference(x, weight, bias, gamma, beta))
    out = jax.block_until_ready(brown_block_forward(x, weight, bias, gamma, beta))
    np.testing.assert_allclose(np.asarray(out), np.asarray(ref), rtol=1e-4, atol=1e-4)

    # --- bf16 MXU-feed path (halves patch / y HBM traffic) -----------------
    out_bf16 = jax.block_until_ready(
        brown_block_forward(x, weight, bias, gamma, beta,
                            compute_dtype=jnp.bfloat16))
    np.testing.assert_allclose(np.asarray(out_bf16), np.asarray(ref),
                               rtol=5e-2, atol=5e-2)

    # --- larger spatial test: exercises the multi-tile / 2-way-split path --
    x2, w2, b2, g2, be2 = _make_inputs(k1, N=2, Cin=4, H=128, W=128, Cout=8)
    ref2 = jax.block_until_ready(_reference(x2, w2, b2, g2, be2))
    out2 = jax.block_until_ready(brown_block_forward(x2, w2, b2, g2, be2))
    np.testing.assert_allclose(np.asarray(out2), np.asarray(ref2),
                               rtol=5e-4, atol=5e-4)

    print("KERNEL_OK")
</pallas_src>

<mosaic_0001>
module attributes {stable_mosaic.version = 11 : i64} {
  func.func @_conv_stats_kernel(%arg0: i32, %arg1: i32, %arg2: memref<128x64xf32, #tpu.memory_space<vmem>>, %arg3: memref<8x64xf32, #tpu.memory_space<vmem>>, %arg4: memref<8x128xf32, #tpu.memory_space<vmem>>, %arg5: memref<1x8x1xf32, #tpu.memory_space<vmem>>, %arg6: memref<1x8x1xf32, #tpu.memory_space<vmem>>) attributes {dimension_semantics = [#tpu.dimension_semantics<parallel>, #tpu.dimension_semantics<arbitrary>], iteration_bounds = array<i64: 1, 1>, scalar_prefetch = 0 : i64, scratch_operands = 0 : i64, tpu.core_type = #tpu.core_type<tc>, window_params = [{transform_indices = @transform_0, window_bounds = array<i64: 128, 64>}, {pipeline_mode = #tpu.pipeline_mode<synchronous>, transform_indices = @transform_1, window_bounds = array<i64: 8, 64>}, {transform_indices = @transform_2, window_bounds = array<i64: 8, 128>}, {transform_indices = @transform_3, window_bounds = array<i64: 1, 8, 1>}, {transform_indices = @transform_4, window_bounds = array<i64: 1, 8, 1>}]} {
    %c0_i32 = arith.constant 0 : i32
    %0 = arith.cmpi eq, %arg1, %c0_i32 : i32
    %1 = arith.extui %0 : i1 to i32
    %c0_i32_0 = arith.constant 0 : i32
    %2 = arith.cmpi ne, %1, %c0_i32_0 : i32
    scf.if %2 {
      %cst_20 = arith.constant 0.000000e+00 : f32
      %20 = vector.broadcast %cst_20 : f32 to vector<1x8x1xf32>
      %c0_21 = arith.constant 0 : index
      %c0_22 = arith.constant 0 : index
      %c0_23 = arith.constant 0 : index
      %21 = vector.load %arg5[%c0_21, %c0_22, %c0_23] : memref<1x8x1xf32, #tpu.memory_space<vmem>>, vector<1x8x1xf32>
      tpu.vector_store %arg5[%c0_21, %c0_22, %c0_23], %20 {strides = array<i32>} : memref<1x8x1xf32, #tpu.memory_space<vmem>>, vector<1x8x1xf32>,
      %cst_24 = arith.constant 0.000000e+00 : f32
      %22 = vector.broadcast %cst_24 : f32 to vector<1x8x1xf32>
      %c0_25 = arith.constant 0 : index
      %c0_26 = arith.constant 0 : index
      %c0_27 = arith.constant 0 : index
      %23 = vector.load %arg6[%c0_25, %c0_26, %c0_27] : memref<1x8x1xf32, #tpu.memory_space<vmem>>, vector<1x8x1xf32>
      tpu.vector_store %arg6[%c0_25, %c0_26, %c0_27], %22 {strides = array<i32>} : memref<1x8x1xf32, #tpu.memory_space<vmem>>, vector<1x8x1xf32>,
    } else {
    }
    %c0 = arith.constant 0 : index
    %c0_1 = arith.constant 0 : index
    %3 = vector.load %arg3[%c0, %c0_1] : memref<8x64xf32, #tpu.memory_space<vmem>>, vector<8x64xf32>
    %c0_2 = arith.constant 0 : index
    %c0_3 = arith.constant 0 : index
    %4 = vector.load %arg2[%c0_2, %c0_3] : memref<128x64xf32, #tpu.memory_space<vmem>>, vector<128x64xf32>
    %cst = arith.constant dense<0.000000e+00> : vector<8x128xf32>
    %5 = tpu.matmul %3, %4, %cst {dimension_numbers = #tpu.dot_dimension_numbers<[1], [1], [0], [0], [0, 0, 1, 0], [], []>} : vector<8x64xf32>, vector<128x64xf32>, vector<8x128xf32> -> vector<8x128xf32>
    %c0_4 = arith.constant 0 : index
    %c0_5 = arith.constant 0 : index
    %6 = vector.load %arg4[%c0_4, %c0_5] : memref<8x128xf32, #tpu.memory_space<vmem>>, vector<8x128xf32>
    tpu.vector_store %arg4[%c0_4, %c0_5], %5 {strides = array<i32>} : memref<8x128xf32, #tpu.memory_space<vmem>>, vector<8x128xf32>,
    %c0_6 = arith.constant 0 : index
    %c0_7 = arith.constant 0 : index
    %c0_8 = arith.constant 0 : index
    %7 = vector.load %arg5[%c0_6, %c0_7, %c0_8] : memref<1x8x1xf32, #tpu.memory_space<vmem>>, vector<1x8x1xf32>
    %cst_9 = arith.constant dense<0.000000e+00> : vector<8xf32>
    %8 = vector.multi_reduction <add>, %5, %cst_9 [1] : vector<8x128xf32> to vector<8xf32>
    %9 = vector.shape_cast %8 : vector<8xf32> to vector<8x1xf32>
    %10 = vector.shape_cast %9 : vector<8x1xf32> to vector<1x8x1xf32>
    %11 = arith.addf %7, %10 : vector<1x8x1xf32>
    %c0_10 = arith.constant 0 : index
    %c0_11 = arith.constant 0 : index
    %c0_12 = arith.constant 0 : index
    %12 = vector.load %arg5[%c0_10, %c0_11, %c0_12] : memref<1x8x1xf32, #tpu.memory_space<vmem>>, vector<1x8x1xf32>
    tpu.vector_store %arg5[%c0_10, %c0_11, %c0_12], %11 {strides = array<i32>} : memref<1x8x1xf32, #tpu.memory_space<vmem>>, vector<1x8x1xf32>,
    %c0_13 = arith.constant 0 : index
    %c0_14 = arith.constant 0 : index
    %c0_15 = arith.constant 0 : index
    %13 = vector.load %arg6[%c0_13, %c0_14, %c0_15] : memref<1x8x1xf32, #tpu.memory_space<vmem>>, vector<1x8x1xf32>
    %14 = arith.mulf %5, %5 : vector<8x128xf32>
    %cst_16 = arith.constant dense<0.000000e+00> : vector<8xf32>
    %15 = vector.multi_reduction <add>, %14, %cst_16 [1] : vector<8x128xf32> to vector<8xf32>
    %16 = vector.shape_cast %15 : vector<8xf32> to vector<8x1xf32>
    %17 = vector.shape_cast %16 : vector<8x1xf32> to vector<1x8x1xf32>
    %18 = arith.addf %13, %17 : vector<1x8x1xf32>
    %c0_17 = arith.constant 0 : index
    %c0_18 = arith.constant 0 : index
    %c0_19 = arith.constant 0 : index
    %19 = vector.load %arg6[%c0_17, %c0_18, %c0_19] : memref<1x8x1xf32, #tpu.memory_space<vmem>>, vector<1x8x1xf32>
    tpu.vector_store %arg6[%c0_17, %c0_18, %c0_19], %18 {strides = array<i32>} : memref<1x8x1xf32, #tpu.memory_space<vmem>>, vector<1x8x1xf32>,
    return
  }
  func.func @transform_0(%arg0: i32, %arg1: i32) -> (i32, i32) {
    %c1_i32 = arith.constant 1 : i32
    %0 = arith.muli %arg0, %c1_i32 : i32
    %1 = arith.addi %0, %arg1 : i32
    %c0_i32 = arith.constant 0 : i32
    %c0_i32_0 = arith.constant 0 : i32
    return %1, %c0_i32 : i32, i32
  }
  func.func @transform_1(%arg0: i32, %arg1: i32) -> (i32, i32) {
    %c0_i32 = arith.constant 0 : i32
    %c0_i32_0 = arith.constant 0 : i32
    %c0_i32_1 = arith.constant 0 : i32
    return %c0_i32, %c0_i32_0 : i32, i32
  }
  func.func @transform_2(%arg0: i32, %arg1: i32) -> (i32, i32) {
    %c1_i32 = arith.constant 1 : i32
    %0 = arith.muli %arg0, %c1_i32 : i32
    %1 = arith.addi %0, %arg1 : i32
    %c0_i32 = arith.constant 0 : i32
    %c0_i32_0 = arith.constant 0 : i32
    return %c0_i32, %1 : i32, i32
  }
  func.func @transform_3(%arg0: i32, %arg1: i32) -> (i32, i32, i32) {
    %c0_i32 = arith.constant 0 : i32
    %c0_i32_0 = arith.constant 0 : i32
    %c0_i32_1 = arith.constant 0 : i32
    return %arg0, %c0_i32, %c0_i32_0 : i32, i32, i32
  }
  func.func @transform_4(%arg0: i32, %arg1: i32) -> (i32, i32, i32) {
    %c0_i32 = arith.constant 0 : i32
    %c0_i32_0 = arith.constant 0 : i32
    %c0_i32_1 = arith.constant 0 : i32
    return %arg0, %c0_i32, %c0_i32_0 : i32, i32, i32
  }
}

</mosaic_0001>

<llo_original>
// kernel: tpu_custom_call.1
$region0: #{tpu_custom_call.1}
  #allocation0 [shape = 'u32[]', space=smem, size = 0x4, offset = 0x4, fixed_abs, tag = 'smem constant byte address 0x4 - core index']
  #allocation1 [shape = 'u32[144,128]{1,0:T(1,128)}', space=vmem, size = 0x12000, scoped, tag = 'internal scratch']
  %s0 = inlined_call_operand.vmem [shape: f32[128,64], index: 0, kind: input, shape index: {}]
  %s1 = inlined_call_operand.vmem [shape: f32[8,64], index: 1, kind: input, shape index: {}]
  %s2 = inlined_call_operand.hbm [shape: f32[8,128], index: 2, kind: output, shape index: {0}]
  %s3 = inlined_call_operand.vmem [shape: f32[1,8,1], index: 3, kind: output, shape index: {1}]
  %s4 = inlined_call_operand.vmem [shape: f32[1,8,1], index: 4, kind: output, shape index: {2}]
  %5 = xla_tuple %s2, %s3, %s4
  %s6 = sld [smem:[#allocation0]]
  $region38: #{tpu_custom_call.1} parent=0
    _
  %s8 = ssub.s32 1, %s6
  %s9 = scalar_select 0, %s8, %s6
  $region1: #{tpu_custom_call.1} parent=0
    #allocation2 [shape = 'u8[4096]{0}', space=vmem, size = 0x1000, scoped, tag = 'output window, operand 0, single buffered']
    #allocation3 [shape = 's32[1]{0}', space=sflag, size = 0x4, scoped, tag = 'scoped memory for tpu_custom_call.1']
    %10 = vsyncpa [#allocation3], 0
    // Predicated region
    $region2: #{tpu_custom_call.1} parent=1 // pred_check
      _
    $region3: #{tpu_custom_call.1} parent=1 // pred_check_branch
      %12 = sbr.rel (0) target = $region5
    $region4: #{tpu_custom_call.1} parent=1 // pred_region
      %s13 = sadd.s32 0, 0
      %s14 = smul.u32 16, %s13
      %p15 = scmp.lt.s32.totalorder %s14, 15
      %s16 = scalar_select %p15, %s14, 15
      %s17 = smul.addr %s16, 8
      %s18 = scalar_lea.vmem %s0, %s17
      %s19 = sadd.s32 0, 0
      %s20 = smul.u32 16, %s19
    $region5: #{tpu_custom_call.1} parent=1 // pred_fallthru
      _
    // Predicated region
    $region6: #{tpu_custom_call.1} parent=1 // pred_check
      _
    $region7: #{tpu_custom_call.1} parent=1 // pred_check_branch
      %22 = sbr.rel (0) target = $region9
    $region8: #{tpu_custom_call.1} parent=1 // pred_region
      _
    $region9: #{tpu_custom_call.1} parent=1 // pred_fallthru
      _
    %s23 = sadd.s32 0, 0
    %s24 = smul.u32 16, %s23
    %p25 = scmp.lt.s32.totalorder %s24, 15
    %s26 = scalar_select %p25, %s24, 15
    %s27 = smul.addr %s26, 8
    %s28 = scalar_lea.vmem %s0, %s27
    %s29 = sadd.s32 0, 0
    %s30 = smul.u32 16, %s29
    %p31 = scmp.lt.s32.totalorder %s30, 15
    %s32 = scalar_select %p31, %s30, 15
    %s33 = smul.addr %s32, 8
    %s34 = scalar_lea.vmem %s0, %s33
    %s35 = sadd.s32 0, 0
    %s36 = smul.u32 16, %s35
    %s37 = sadd.s32 0, 0
    %p38 = scmp.eq.s32.totalorder 0, 0
    // Predicated region
    $region10: #{tpu_custom_call.1} parent=1 // pred_check
      %p39 = pneg %p38
    $region11: #{tpu_custom_call.1} parent=1 // pred_check_branch
      %41 = sbr.rel (%p39) target = $region13
    $region12: #{tpu_custom_call.1} parent=1 // pred_region
      %vm42 = vcmask 7168
      %43 = vst.msk [vmem:[%s3] sm:$0xff] %vm42, 0.0
      %44 = vst.msk [vmem:[%s4] sm:$0xff] %vm42, 0.0
    $region13: #{tpu_custom_call.1} parent=1 // pred_fallthru
      _
    %v45 = vld [vmem:[%s1] sm:$0xff]
    %v46 = vld [vmem:[%s34] sm:$0xff]
    %v47 = vld [vmem:[%s34 + $0x8] sm:$0xff]
    %v48 = vld [vmem:[%s34 + $0x10] sm:$0xff]
    %v49 = vld [vmem:[%s34 + $0x18] sm:$0xff]
    %v50 = vld [vmem:[%s34 + $0x20] sm:$0xff]
    %v51 = vld [vmem:[%s34 + $0x28] sm:$0xff]
    %v52 = vld [vmem:[%s34 + $0x30] sm:$0xff]
    %v53 = vld [vmem:[%s34 + $0x38] sm:$0xff]
    %v54 = vld [vmem:[%s34 + $0x40] sm:$0xff]
    %v55 = vld [vmem:[%s34 + $0x48] sm:$0xff]
    %v56 = vld [vmem:[%s34 + $0x50] sm:$0xff]
    %v57 = vld [vmem:[%s34 + $0x58] sm:$0xff]
    %v58 = vld [vmem:[%s34 + $0x60] sm:$0xff]
    %v59 = vld [vmem:[%s34 + $0x68] sm:$0xff]
    %v60 = vld [vmem:[%s34 + $0x70] sm:$0xff]
    %v61 = vld [vmem:[%s34 + $0x78] sm:$0xff]
    %vm62 = vcmask 523264
    %v64 = vsel %vm62, %v45, 0
    %v67 = vsel %vm62, %v46, 0
    %v70 = vsel %vm62, %v47, 0
    %v73 = vsel %vm62, %v48, 0
    %v76 = vsel %vm62, %v49, 0
    %v79 = vsel %vm62, %v50, 0
    %v82 = vsel %vm62, %v51, 0
    %v85 = vsel %vm62, %v52, 0
    %v88 = vsel %vm62, %v53, 0
    %v91 = vsel %vm62, %v54, 0
    %v94 = vsel %vm62, %v55, 0
    %v97 = vsel %vm62, %v56, 0
    %v100 = vsel %vm62, %v57, 0
    %v103 = vsel %vm62, %v58, 0
    %v106 = vsel %vm62, %v59, 0
    %v109 = vsel %vm62, %v60, 0
    %v112 = vsel %vm62, %v61, 0
    %114 = vmatprep.subr.mxu0 0.0
    %115 = vmatpush1.xpose.msra.mxu0 %v67
    %116 = vmatprep.subr.mxu0 0.0
    %117 = vmatpush1.xpose.msra.mxu0 %v70
    %118 = vmatprep.subr.mxu0 0.0
    %119 = vmatpush1.xpose.msra.mxu0 %v73
    %120 = vmatprep.subr.mxu0 0.0
    %121 = vmatpush1.xpose.msra.mxu0 %v76
    %122 = vmatprep.subr.mxu0 0.0
    %123 = vmatpush1.xpose.msra.mxu0 %v79
    %124 = vmatprep.subr.mxu0 0.0
    %125 = vmatpush1.xpose.msra.mxu0 %v82
    %126 = vmatprep.subr.mxu0 0.0
    %127 = vmatpush1.xpose.msra.mxu0 %v85
    %128 = vmatprep.subr.mxu0 0.0
    %129 = vmatpush1.xpose.msra.mxu0 %v88
    %130 = vmatprep.subr.mxu0 0.0
    %131 = vmatpush1.xpose.msra.mxu0 %v91
    %132 = vmatprep.subr.mxu0 0.0
    %133 = vmatpush1.xpose.msra.mxu0 %v94
    %134 = vmatprep.subr.mxu0 0.0
    %135 = vmatpush1.xpose.msra.mxu0 %v97
    %136 = vmatprep.subr.mxu0 0.0
    %137 = vmatpush1.xpose.msra.mxu0 %v100
    %138 = vmatprep.subr.mxu0 0.0
    %139 = vmatpush1.xpose.msra.mxu0 %v103
    %140 = vmatprep.subr.mxu0 0.0
    %141 = vmatpush1.xpose.msra.mxu0 %v106
    %142 = vmatprep.subr.mxu0 0.0
    %143 = vmatpush1.xpose.msra.mxu0 %v109
    %144 = vmatprep.subr.mxu0 0.0
    %145 = vmatpush1.xpose.msra.mxu0 %v112
    %146 = vmatprep.subr.mxu0 0.0
    %147 = vmatpush1.xpose.msra.mxu0 0.0
    %148 = vmatprep.subr.mxu0 0.0
    %149 = vmatpush1.xpose.msra.mxu0 0.0
    %150 = vmatprep.subr.mxu0 0.0
    %151 = vmatpush1.xpose.msra.mxu0 0.0
    %152 = vmatprep.subr.mxu0 0.0
    %153 = vmatpush1.xpose.msra.mxu0 0.0
    %154 = vmatprep.subr.mxu0 0.0
    %155 = vmatpush1.xpose.msra.mxu0 0.0
    %156 = vmatprep.subr.mxu0 0.0
    %157 = vmatpush1.xpose.msra.mxu0 0.0
    %158 = vmatprep.subr.mxu0 0.0
    %159 = vmatpush1.xpose.msra.mxu0 0.0
    %160 = vmatprep.subr.mxu0 0.0
    %161 = vmatpush1.xpose.msra.mxu0 0.0
    %162 = vmatprep.subr.mxu0 0.0
    %163 = vmatpush1.xpose.msra.mxu0 0.0
    %164 = vmatprep.subr.mxu0 0.0
    %165 = vmatpush1.xpose.msra.mxu0 0.0
    %166 = vmatprep.subr.mxu0 0.0
    %167 = vmatpush1.xpose.msra.mxu0 0.0
    %168 = vmatprep.subr.mxu0 0.0
    %169 = vmatpush1.xpose.msra.mxu0 0.0
    %170 = vmatprep.subr.mxu0 0.0
    %171 = vmatpush1.xpose.msra.mxu0 0.0
    %172 = vmatprep.subr.mxu0 0.0
    %173 = vmatpush1.xpose.msra.mxu0 0.0
    %174 = vmatprep.subr.mxu0 0.0
    %175 = vmatpush1.xpose.msra.mxu0 0.0
    %176 = vmatprep.subr.mxu0 0.0
    %177 = vmatpush1.xpose.msra.mxu0 0.0
    %178 = vmatprep.mubr.f32.mxu0 0.0
    %179 = vmatmul.mubr.f32.gmra.mrb[0].mxu0 %v64
    %v180 = vpop.f32.mrb[0].mxu0
    %v181 = vadd.f32 0.0, %v180
    %v182 = vpop.f32.mrb[0].mxu0
    %183 = vdwg.mxu0
    %184 = vst [vmem:[#allocation2] sm:$0xff] %v181
    %v185 = vld [vmem:[%s3] sm:$0xff]
    %186 = vadd.xlane.f32.xlu0 %v181
    %v187 = vpop.xlane.xlu0 %186
    %v188 = vadd.f32 %v185, %v187
    %vm189 = vcmask 7168
    %190 = vst.msk [vmem:[%s3] sm:$0xff] %vm189, %v188
    %v191 = vld [vmem:[%s4] sm:$0xff]
    %v192 = vmul.f32 %v181, %v181
    %193 = vadd.xlane.f32.xlu0 %v192
    %v194 = vpop.xlane.xlu0 %193
    %v195 = vadd.f32 %v191, %v194
    %196 = vst.msk [vmem:[%s4] sm:$0xff] %vm189, %v195
    // Predicated region
    $region14: #{tpu_custom_call.1} parent=1 // pred_check
      _
    $region15: #{tpu_custom_call.1} parent=1 // pred_check_branch
      %198 = sbr.rel (0) target = $region17
    $region16: #{tpu_custom_call.1} parent=1 // pred_region
      %s199 = sadd.s32 0, 0
      %s201 = ssub.s32 128, 128
      %202 = vsyncadd [#allocation3], %s201
      %s203 = smul.addr %s199, 128
      %s204 = scalar_lea.hbm %s2, %s203
      %s206 = sshll.u32 [#allocation2], 4
      %s207 = int_to_ptr.vmem [resolvable:$true] %s206
      %209 = dma.vmem_to_hbm [thread:$0]  %s207, 128, %s204, [#allocation3]
    $region17: #{tpu_custom_call.1} parent=1 // pred_fallthru
      _
    // Predicated region
    $region18: #{tpu_custom_call.1} parent=1 // pred_check
      _
    $region19: #{tpu_custom_call.1} parent=1 // pred_check_branch
      %211 = sbr.rel (0) target = $region21
    $region20: #{tpu_custom_call.1} parent=1 // pred_region
      _
    $region21: #{tpu_custom_call.1} parent=1 // pred_fallthru
      _
    // Predicated region
    $region22: #{tpu_custom_call.1} parent=1 // pred_check
      _
    $region23: #{tpu_custom_call.1} parent=1 // pred_check_branch
      %213 = sbr.rel (0) target = $region25
    $region24: #{tpu_custom_call.1} parent=1 // pred_region
      _
    $region25: #{tpu_custom_call.1} parent=1 // pred_fallthru
      _
    // Predicated region
    $region26: #{tpu_custom_call.1} parent=1 // pred_check
      _
    $region27: #{tpu_custom_call.1} parent=1 // pred_check_branch
      %215 = sbr.rel (0) target = $region29
    $region28: #{tpu_custom_call.1} parent=1 // pred_region
      %216 = dma.done [#allocation3], 128
    $region29: #{tpu_custom_call.1} parent=1 // pred_fallthru
      _
    // Predicated region
    $region30: #{tpu_custom_call.1} parent=1 // pred_check
      _
    $region31: #{tpu_custom_call.1} parent=1 // pred_check_branch
      %218 = sbr.rel (0) target = $region33
    $region32: #{tpu_custom_call.1} parent=1 // pred_region
      _
    $region33: #{tpu_custom_call.1} parent=1 // pred_fallthru
      _
    // Predicated region
    $region34: #{tpu_custom_call.1} parent=1 // pred_check
      _
    $region35: #{tpu_custom_call.1} parent=1 // pred_check_branch
      %220 = sbr.rel (0) target = $region37
    $region36: #{tpu_custom_call.1} parent=1 // pred_region
      _
    $region37: #{tpu_custom_call.1} parent=1 // pred_fallthru
      _
    %221 = vsyncpa [#allocation3], 1

</llo_original>
